<compile_context>
chip_gen: v7x
topology: tpu7x:2x2x1
jax: 0.10.0
libtpu: 0.0.40
codegen_flags: <defaults>
</compile_context>

<pallas_src>
import jax
import jax.numpy as jnp
from jax import lax
from jax.experimental import pallas as pl
from jax.experimental.pallas import tpu as pltpu

EPS = 1e-5
_LANE = 128
_MIB = 1024 * 1024


def _round_up(a, b):
    return (a + b - 1) // b * b


def _tpu_generation_params():
    """Returns (physical VMEM bytes, #TensorCores sharing the grid), conservative fallback."""
    vmem_physical = 64 * _MIB          # conservative default (v7x-sized VMEM)
    n_cores = 2                        # conservative: assume multi-TC chip
    try:
        kind = getattr(jax.devices()[0], "device_kind", "").lower()
        if "v7" in kind:
            vmem_physical, n_cores = 64 * _MIB, 2
        elif "v6" in kind or "v5e" in kind or "v5 lite" in kind or "v5litepod" in kind:
            vmem_physical, n_cores = 128 * _MIB, 1
        elif "v5p" in kind or "v4" in kind:
            vmem_physical, n_cores = 128 * _MIB, 2
    except Exception:
        pass
    try:
        info = pltpu.get_tpu_info()
        vmem_physical = int(getattr(info, "vmem_capacity_bytes", vmem_physical))
    except Exception:
        pass
    return vmem_physical, n_cores


def cbn1d_kernel(one_hot_ref, x_ref, scale_tbl_ref, shift_tbl_ref, o_ref):
    """One channel tile: full batch N x TC channels.

    one_hot_ref:   (N, in_f)  f32 one-hot of class index (same block every tile)
    x_ref:         (N, TC)    activations
    scale_tbl_ref: (in_f, TC) embedding weights (scale)
    shift_tbl_ref: (in_f, TC) embedding weights (shift)
    o_ref:         (N, TC)    output
    """
    x = x_ref[...]
    if x.dtype != jnp.float32:          # static dtype check; no-op for f32 inputs
        x = x.astype(jnp.float32)
    n = x.shape[0]
    inv_n = jnp.float32(1.0 / n)

    # Fused single-sweep per-channel batch statistics (biased variance,
    # PyTorch training forward): var = E[x^2] - mean^2 in f32.
    s1 = jnp.sum(x, axis=0, keepdims=True)                       # (1, TC)
    s2 = jnp.sum(x * x, axis=0, keepdims=True)                   # (1, TC)
    mean = s1 * inv_n
    var = jnp.maximum(s2 * inv_n - mean * mean, 0.0)             # guard cancellation
    inv_std = lax.rsqrt(var + EPS)                               # (1, TC)

    # In-kernel embedding gather via one-hot matmul (rides the otherwise-idle MXU).
    one_hot = one_hot_ref[...]
    scale_tbl = scale_tbl_ref[...]
    shift_tbl = shift_tbl_ref[...]
    if scale_tbl.dtype != jnp.float32:
        scale_tbl = scale_tbl.astype(jnp.float32)
        shift_tbl = shift_tbl.astype(jnp.float32)
    scale = jnp.dot(one_hot, scale_tbl, preferred_element_type=jnp.float32)  # (N, TC)
    shift = jnp.dot(one_hot, shift_tbl, preferred_element_type=jnp.float32)  # (N, TC)

    # Single fused normalize-scale-shift expression straight to the output ref
    # (no extra materialized (N, TC) temporaries on the store path).
    o_ref[...] = ((x - mean) * inv_std * scale + shift).astype(o_ref.dtype)


def cbn1d(x, y, scale_table, shift_table, *, tc=None):
    """Conditional BatchNorm1d forward.

    x: (N, C) float, y: (N,) integer class indices in [0, in_f),
    scale_table / shift_table: (in_f, C) embedding weights.
    """
    N, C = x.shape
    in_f = scale_table.shape[0]
    cp = _round_up(C, _LANE)            # lane-rounded channel extent (last tile ragged)

    # ---- generation-aware VMEM budget & tile cap ------------------------------
    vmem_physical, n_cores = _tpu_generation_params()
    budget = min(48 * _MIB, max(12 * _MIB, vmem_physical - 24 * _MIB))
    vmem_limit = min(vmem_physical - 8 * _MIB, budget + 16 * _MIB)
    tc_cap = 2048 if vmem_physical >= 96 * _MIB else 1024

    # ---- channel-tile sizing (lane-dense multiple of 128) ---------------------
    if tc is None:
        x_bytes = jnp.dtype(x.dtype).itemsize
        # Per-lane-column footprint: double-buffered x + out pipeline blocks,
        # double-buffered table columns, plus ~3 simultaneously-live (N, tc) f32
        # in-kernel temporaries (scale, shift, normalized x) that can't sit in
        # 64 vregs and land in Mosaic internal scratch.
        bytes_per_col = (2 * N * x_bytes          # x pipeline buffers
                         + 2 * N * x_bytes        # out pipeline buffers
                         + 3 * N * 4              # in-kernel (N, tc) f32 temporaries
                         + 2 * 2 * in_f * 4)      # scale/shift table pipeline buffers
        fixed = 2 * N * in_f * 4                  # one-hot block (same block every tile)
        tc = max(_LANE, ((budget - fixed) // bytes_per_col) // _LANE * _LANE)
    tc = min(_round_up(tc, _LANE), tc_cap, cp)

    # Keep >= 2 channel tiles on multi-TensorCore chips (v7x) so the "parallel"
    # grid axis feeds both cores' DMA streams; no-op on single-TC v5e/v6e.
    if n_cores >= 2 and cp >= 2 * _LANE:
        tc = min(tc, max(_LANE, (cp // 2) // _LANE * _LANE))

    # One-hot built once in the wrapper (N*in_f f32 words of HBM — negligible).
    one_hot = (y.astype(jnp.int32)[:, None] ==
               jnp.arange(in_f, dtype=jnp.int32)[None, :]).astype(jnp.float32)

    grid = (pl.cdiv(C, tc),)
    return pl.pallas_call(
        cbn1d_kernel,
        out_shape=jax.ShapeDtypeStruct((N, C), x.dtype),     # no padded output / no slice
        grid_spec=pl.GridSpec(
            grid=grid,
            in_specs=[
                pl.BlockSpec((N, in_f), lambda j: (0, 0)),    # one-hot(y), same every tile
                pl.BlockSpec((N, tc), lambda j: (0, j)),      # x (last tile ragged)
                pl.BlockSpec((in_f, tc), lambda j: (0, j)),   # scale table
                pl.BlockSpec((in_f, tc), lambda j: (0, j)),   # shift table
            ],
            out_specs=pl.BlockSpec((N, tc), lambda j: (0, j)),
        ),
        compiler_params=pltpu.CompilerParams(
            dimension_semantics=("parallel",),                # channel tiles independent
            vmem_limit_bytes=int(vmem_limit)),
    )(one_hot, x, scale_table, shift_table)


def cbn1d_ref(x, y, scale_table, shift_table):
    scale = jnp.take(scale_table, y, axis=0)
    shift = jnp.take(shift_table, y, axis=0)
    mean = jnp.mean(x, axis=0, keepdims=True)
    var = jnp.mean(jnp.square(x - mean), axis=0, keepdims=True)
    x_hat = (x - mean) / jnp.sqrt(var + EPS)
    return x_hat * scale + shift


if __name__ == "__main__":
    key = jax.random.PRNGKey(0)

    # Case 1: small lane-dense shape (N=8, in_f=4, bn_f=256).
    N, in_f, bn_f = 8, 4, 256
    kx, ky, ks, kh, key = jax.random.split(key, 5)
    x = jax.random.normal(kx, (N, bn_f), dtype=jnp.float32)
    y = jax.random.randint(ky, (N,), 0, in_f, dtype=jnp.int32)
    scale_table = jax.random.normal(ks, (in_f, bn_f), dtype=jnp.float32)
    shift_table = jax.random.normal(kh, (in_f, bn_f), dtype=jnp.float32)

    out = jax.block_until_ready(cbn1d(x, y, scale_table, shift_table))
    ref = jax.block_until_ready(cbn1d_ref(x, y, scale_table, shift_table))
    assert out.shape == (N, bn_f) and out.dtype == jnp.float32
    assert jnp.allclose(out, ref, atol=1e-4, rtol=1e-4), "mismatch vs. reference (case 1)"

    # Case 2: non-128-multiple C (exercises ragged last tile, no wrapper padding)
    # with a forced multi-tile grid (tc=128).
    N2, in_f2, bn_f2 = 16, 4, 300
    kx, ky, ks, kh, key = jax.random.split(key, 5)
    x2 = jax.random.normal(kx, (N2, bn_f2), dtype=jnp.float32)
    y2 = jax.random.randint(ky, (N2,), 0, in_f2, dtype=jnp.int32)
    scale_table2 = jax.random.normal(ks, (in_f2, bn_f2), dtype=jnp.float32)
    shift_table2 = jax.random.normal(kh, (in_f2, bn_f2), dtype=jnp.float32)

    out2 = jax.block_until_ready(cbn1d(x2, y2, scale_table2, shift_table2, tc=128))
    ref2 = jax.block_until_ready(cbn1d_ref(x2, y2, scale_table2, shift_table2))
    assert out2.shape == (N2, bn_f2)
    assert jnp.allclose(out2, ref2, atol=1e-4, rtol=1e-4), "mismatch vs. reference (case 2)"

    print("KERNEL_OK")
</pallas_src>

<mosaic_0001>
module attributes {stable_mosaic.version = 11 : i64} {
  func.func @cbn1d_kernel(%arg0: i32, %arg1: memref<8x4xf32, #tpu.memory_space<vmem>>, %arg2: memref<8x128xf32, #tpu.memory_space<vmem>>, %arg3: memref<4x128xf32, #tpu.memory_space<vmem>>, %arg4: memref<4x128xf32, #tpu.memory_space<vmem>>, %arg5: memref<8x128xf32, #tpu.memory_space<vmem>>) attributes {dimension_semantics = [#tpu.dimension_semantics<parallel>], iteration_bounds = array<i64: 2>, scalar_prefetch = 0 : i64, scratch_operands = 0 : i64, tpu.core_type = #tpu.core_type<tc>, window_params = [{pipeline_mode = #tpu.pipeline_mode<synchronous>, transform_indices = @transform_0, window_bounds = array<i64: 8, 4>}, {transform_indices = @transform_1, window_bounds = array<i64: 8, 128>}, {transform_indices = @transform_2, window_bounds = array<i64: 4, 128>}, {transform_indices = @transform_3, window_bounds = array<i64: 4, 128>}, {transform_indices = @transform_4, window_bounds = array<i64: 8, 128>}]} {
    %c0 = arith.constant 0 : index
    %c0_0 = arith.constant 0 : index
    %0 = vector.load %arg2[%c0, %c0_0] : memref<8x128xf32, #tpu.memory_space<vmem>>, vector<8x128xf32>
    %cst = arith.constant dense<0.000000e+00> : vector<128xf32>
    %1 = vector.multi_reduction <add>, %0, %cst [0] : vector<8x128xf32> to vector<128xf32>
    %2 = vector.shape_cast %1 : vector<128xf32> to vector<1x128xf32>
    %3 = arith.mulf %0, %0 : vector<8x128xf32>
    %cst_1 = arith.constant dense<0.000000e+00> : vector<128xf32>
    %4 = vector.multi_reduction <add>, %3, %cst_1 [0] : vector<8x128xf32> to vector<128xf32>
    %5 = vector.shape_cast %4 : vector<128xf32> to vector<1x128xf32>
    %cst_2 = arith.constant 1.250000e-01 : f32
    %6 = vector.broadcast %cst_2 : f32 to vector<1x128xf32>
    %7 = arith.mulf %2, %6 : vector<1x128xf32>
    %cst_3 = arith.constant 1.250000e-01 : f32
    %8 = vector.broadcast %cst_3 : f32 to vector<1x128xf32>
    %9 = arith.mulf %5, %8 : vector<1x128xf32>
    %10 = arith.mulf %7, %7 : vector<1x128xf32>
    %11 = arith.subf %9, %10 : vector<1x128xf32>
    %cst_4 = arith.constant 0.000000e+00 : f32
    %12 = vector.broadcast %cst_4 : f32 to vector<1x128xf32>
    %13 = arith.maximumf %11, %12 : vector<1x128xf32>
    %cst_5 = arith.constant 9.99999974E-6 : f32
    %14 = vector.broadcast %cst_5 : f32 to vector<1x128xf32>
    %15 = arith.addf %13, %14 : vector<1x128xf32>
    %16 = math.rsqrt %15 : vector<1x128xf32>
    %c0_6 = arith.constant 0 : index
    %c0_7 = arith.constant 0 : index
    %17 = vector.load %arg1[%c0_6, %c0_7] : memref<8x4xf32, #tpu.memory_space<vmem>>, vector<8x4xf32>
    %c0_8 = arith.constant 0 : index
    %c0_9 = arith.constant 0 : index
    %18 = vector.load %arg3[%c0_8, %c0_9] : memref<4x128xf32, #tpu.memory_space<vmem>>, vector<4x128xf32>
    %c0_10 = arith.constant 0 : index
    %c0_11 = arith.constant 0 : index
    %19 = vector.load %arg4[%c0_10, %c0_11] : memref<4x128xf32, #tpu.memory_space<vmem>>, vector<4x128xf32>
    %cst_12 = arith.constant dense<0.000000e+00> : vector<8x128xf32>
    %20 = tpu.matmul %17, %18, %cst_12 {dimension_numbers = #tpu.dot_dimension_numbers<[1], [0], [0], [1], [0, 0, 1, 1], [], []>} : vector<8x4xf32>, vector<4x128xf32>, vector<8x128xf32> -> vector<8x128xf32>
    %cst_13 = arith.constant dense<0.000000e+00> : vector<8x128xf32>
    %21 = tpu.matmul %17, %19, %cst_13 {dimension_numbers = #tpu.dot_dimension_numbers<[1], [0], [0], [1], [0, 0, 1, 1], [], []>} : vector<8x4xf32>, vector<4x128xf32>, vector<8x128xf32> -> vector<8x128xf32>
    %22 = vector.broadcast %7 : vector<1x128xf32> to vector<8x128xf32>
    %23 = arith.subf %0, %22 : vector<8x128xf32>
    %24 = vector.broadcast %16 : vector<1x128xf32> to vector<8x128xf32>
    %25 = arith.mulf %23, %24 : vector<8x128xf32>
    %26 = arith.mulf %25, %20 : vector<8x128xf32>
    %27 = arith.addf %26, %21 : vector<8x128xf32>
    %c0_14 = arith.constant 0 : index
    %c0_15 = arith.constant 0 : index
    %28 = vector.load %arg5[%c0_14, %c0_15] : memref<8x128xf32, #tpu.memory_space<vmem>>, vector<8x128xf32>
    tpu.vector_store %arg5[%c0_14, %c0_15], %27 {strides = array<i32>} : memref<8x128xf32, #tpu.memory_space<vmem>>, vector<8x128xf32>,
    return
  }
  func.func @transform_0(%arg0: i32) -> (i32, i32) {
    %c0_i32 = arith.constant 0 : i32
    %c0_i32_0 = arith.constant 0 : i32
    %c0_i32_1 = arith.constant 0 : i32
    return %c0_i32, %c0_i32_0 : i32, i32
  }
  func.func @transform_1(%arg0: i32) -> (i32, i32) {
    %c0_i32 = arith.constant 0 : i32
    %c0_i32_0 = arith.constant 0 : i32
    return %c0_i32, %arg0 : i32, i32
  }
  func.func @transform_2(%arg0: i32) -> (i32, i32) {
    %c0_i32 = arith.constant 0 : i32
    %c0_i32_0 = arith.constant 0 : i32
    return %c0_i32, %arg0 : i32, i32
  }
  func.func @transform_3(%arg0: i32) -> (i32, i32) {
    %c0_i32 = arith.constant 0 : i32
    %c0_i32_0 = arith.constant 0 : i32
    return %c0_i32, %arg0 : i32, i32
  }
  func.func @transform_4(%arg0: i32) -> (i32, i32) {
    %c0_i32 = arith.constant 0 : i32
    %c0_i32_0 = arith.constant 0 : i32
    return %c0_i32, %arg0 : i32, i32
  }
}

</mosaic_0001>

<llo_original>
// kernel: tpu_custom_call.1
$region0: #{tpu_custom_call.1}
  #allocation0 [shape = 'u32[]', space=smem, size = 0x4, offset = 0x4, fixed_abs, tag = 'smem constant byte address 0x4 - core index']
  #allocation1 [shape = 'u32[144,128]{1,0:T(1,128)}', space=vmem, size = 0x12000, scoped, tag = 'internal scratch']
  %s0 = inlined_call_operand.vmem [shape: f32[8,4], index: 0, kind: input, shape index: {}]
  %s1 = inlined_call_operand.hbm [shape: f32[8,256], index: 1, kind: input, shape index: {}]
  %s2 = inlined_call_operand.vmem [shape: f32[4,256], index: 2, kind: input, shape index: {}]
  %s3 = inlined_call_operand.vmem [shape: f32[4,256], index: 3, kind: input, shape index: {}]
  %s4 = inlined_call_operand.hbm [shape: f32[8,256], index: 4, kind: output, shape index: {}]
  %s5 = sld [smem:[#allocation0]]
  $region53: #{tpu_custom_call.1} parent=0
    _
  %s7 = ssub.s32 1, %s5
  %s8 = scalar_select 0, %s7, %s5
  $region1: #{tpu_custom_call.1} parent=0
    #allocation2 [shape = 'u8[8192]{0}', space=vmem, size = 0x2000, scoped, tag = 'input window, operand 1']
    #allocation3 [shape = 's32[2]{0}', space=sflag, size = 0x8, scoped, tag = 'scoped memory for tpu_custom_call.1']
    #allocation4 [shape = 's32[2]{0}', space=sflag, size = 0x8, scoped, tag = 'scoped memory for tpu_custom_call.1']
    #allocation5 [shape = 'u8[8192]{0}', space=vmem, size = 0x2000, scoped, tag = 'output window, operand 0']
    %9 = vsyncpa [#allocation3], 0
    %s10 = scalar_lea.sflag [#allocation3], 1
    %11 = vsyncpa %s10, 0
    %12 = vsyncpa [#allocation4], 0
    %s13 = scalar_lea.sflag [#allocation4], 1
    %14 = vsyncpa %s13, 0
    loop: start=0, step=1, limit=4
    $region2: #{tpu_custom_call.1} parent=1 // loop_pre_header
      _
    $region3: #{tpu_custom_call.1} parent=1 // loop_header
      %s16 = sphi 0, %s20
      %p17 = scmp.ge.s32.totalorder %s16, 4
      %s24 = sphi 0, %s24
      %s26 = sphi 0, %s24
      %s27 = sphi 0, %s26
      %s41 = sphi 0, %s27
      %s47 = sphi 0, %s49
      %s50 = sphi 0, %s47
      %s51 = sphi 0, %s50
      %s67 = sphi 0, %s51
      %s73 = sphi 0, %s75
      %s76 = sphi 0, %s73
      %s77 = sphi 0, %s76
      %s93 = sphi 0, %s77
      %s99 = sphi 0, %s101
      %s102 = sphi 0, %s99
      %s103 = sphi 0, %s102
      %s119 = sphi 0, %s103
      %s125 = sphi 0, %s127
      %s128 = sphi 0, %s125
      %s129 = sphi 0, %s128
      %s145 = sphi 0, %s129
    $region4: #{tpu_custom_call.1} parent=1 // loop_header_branch
      %19 = sbr.rel (%p17) target = $region8
    $region5: #{tpu_custom_call.1} parent=1 // loop_body
      %s21 = ssub.s32 %s16, 1
      %s22 = ssub.s32 %s16, 2
      %s23 = sadd.s32 %s16, 1
      %s25 = sadd.s32 %s24, 1
      %p28 = scmp.eq.s32.totalorder %s16, 1
      %p29 = scmp.ne.s32.totalorder %s24, %s26
      %p30 = scmp.eq.s32.totalorder %s16, 0
      %p31 = por %p29, %p30
      %p32 = scmp.ne.s32.totalorder %s24, %s26
      %p33 = scmp.eq.s32.totalorder %s21, 1
      %p34 = por %p32, %p33
      %p35 = scmp.ne.s32.totalorder %s26, %s27
      %p36 = scmp.eq.s32.totalorder %s21, 0
      %p37 = por %p35, %p36
      %p38 = scmp.ne.s32.totalorder %s26, %s27
      %p39 = scmp.eq.s32.totalorder %s22, 1
      %p40 = por %p38, %p39
      %p42 = scmp.ne.s32.totalorder %s27, %s41
      %p43 = scmp.eq.s32.totalorder %s22, 0
      %p44 = por %p42, %p43
      %s45 = ssub.s32 %s16, %s23
      %p46 = scmp.eq.s32.totalorder %s45, 0
      %s48 = sadd.s32 %s47, 1
      %s49 = scalar_select %p46, %s47, %s48
      %p52 = pneg %p46
      %p53 = scmp.eq.s32.totalorder %s16, 1
      %p54 = por %p52, %p53
      %p55 = scmp.ne.s32.totalorder %s47, %s50
      %p56 = scmp.eq.s32.totalorder %s16, 0
      %p57 = por %p55, %p56
      %p58 = scmp.ne.s32.totalorder %s47, %s50
      %p59 = scmp.eq.s32.totalorder %s21, 1
      %p60 = por %p58, %p59
      %p61 = scmp.ne.s32.totalorder %s50, %s51
      %p62 = scmp.eq.s32.totalorder %s21, 0
      %p63 = por %p61, %p62
      %p64 = scmp.ne.s32.totalorder %s50, %s51
      %p65 = scmp.eq.s32.totalorder %s22, 1
      %p66 = por %p64, %p65
      %p68 = scmp.ne.s32.totalorder %s51, %s67
      %p69 = scmp.eq.s32.totalorder %s22, 0
      %p70 = por %p68, %p69
      %s71 = ssub.s32 %s16, %s23
      %p72 = scmp.eq.s32.totalorder %s71, 0
      %s74 = sadd.s32 %s73, 1
      %s75 = scalar_select %p72, %s73, %s74
      %p78 = pneg %p72
      %p79 = scmp.eq.s32.totalorder %s16, 1
      %p80 = por %p78, %p79
      %p81 = scmp.ne.s32.totalorder %s73, %s76
      %p82 = scmp.eq.s32.totalorder %s16, 0
      %p83 = por %p81, %p82
      %p84 = scmp.ne.s32.totalorder %s73, %s76
      %p85 = scmp.eq.s32.totalorder %s21, 1
      %p86 = por %p84, %p85
      %p87 = scmp.ne.s32.totalorder %s76, %s77
      %p88 = scmp.eq.s32.totalorder %s21, 0
      %p89 = por %p87, %p88
      %p90 = scmp.ne.s32.totalorder %s76, %s77
      %p91 = scmp.eq.s32.totalorder %s22, 1
      %p92 = por %p90, %p91
      %p94 = scmp.ne.s32.totalorder %s77, %s93
      %p95 = scmp.eq.s32.totalorder %s22, 0
      %p96 = por %p94, %p95
      %s97 = ssub.s32 %s16, %s23
      %p98 = scmp.eq.s32.totalorder %s97, 0
      %s100 = sadd.s32 %s99, 1
      %s101 = scalar_select %p98, %s99, %s100
      %p104 = pneg %p98
      %p105 = scmp.eq.s32.totalorder %s16, 1
      %p106 = por %p104, %p105
      %p107 = scmp.ne.s32.totalorder %s99, %s102
      %p108 = scmp.eq.s32.totalorder %s16, 0
      %p109 = por %p107, %p108
      %p110 = scmp.ne.s32.totalorder %s99, %s102
      %p111 = scmp.eq.s32.totalorder %s21, 1
      %p112 = por %p110, %p111
      %p113 = scmp.ne.s32.totalorder %s102, %s103
      %p114 = scmp.eq.s32.totalorder %s21, 0
      %p115 = por %p113, %p114
      %p116 = scmp.ne.s32.totalorder %s102, %s103
      %p117 = scmp.eq.s32.totalorder %s22, 1
      %p118 = por %p116, %p117
      %p120 = scmp.ne.s32.totalorder %s103, %s119
      %p121 = scmp.eq.s32.totalorder %s22, 0
      %p122 = por %p120, %p121
      %s123 = ssub.s32 %s16, %s23
      %p124 = scmp.eq.s32.totalorder %s123, 0
      %s126 = sadd.s32 %s125, 1
      %s127 = scalar_select %p124, %s125, %s126
      %p130 = pneg %p124
      %p131 = scmp.eq.s32.totalorder %s16, 1
      %p132 = por %p130, %p131
      %p133 = scmp.ne.s32.totalorder %s125, %s128
      %p134 = scmp.eq.s32.totalorder %s16, 0
      %p135 = por %p133, %p134
      %p136 = scmp.ne.s32.totalorder %s125, %s128
      %p137 = scmp.eq.s32.totalorder %s21, 1
      %p138 = por %p136, %p137
      %p139 = scmp.ne.s32.totalorder %s128, %s129
      %p140 = scmp.eq.s32.totalorder %s21, 0
      %p141 = por %p139, %p140
      %p142 = scmp.ne.s32.totalorder %s128, %s129
      %p143 = scmp.eq.s32.totalorder %s22, 1
      %p144 = por %p142, %p143
      %p146 = scmp.ne.s32.totalorder %s129, %s145
      %p147 = scmp.eq.s32.totalorder %s22, 0
      %p148 = por %p146, %p147
      %p149 = scmp.le.s32.totalorder 1, %s16
      %p150 = scmp.lt.s32.totalorder %s16, 3
      %p151 = pnand %p149, %p150
      %p152 = pneg %p151
      // Predicated region
      $region9: #{tpu_custom_call.1} parent=5 // pred_check
        _
      $region10: #{tpu_custom_call.1} parent=5 // pred_check_branch
        %154 = sbr.rel (%p151) target = $region12
      $region11: #{tpu_custom_call.1} parent=5 // pred_region
        %s155 = ssub.s32 %s16, 1
        // Predicated region
        $region13: #{tpu_custom_call.1} parent=11 // pred_check
          %p156 = pneg %p37
        $region14: #{tpu_custom_call.1} parent=11 // pred_check_branch
          %158 = sbr.rel (%p156) target = $region16
        $region15: #{tpu_custom_call.1} parent=11 // pred_region
          _
        $region16: #{tpu_custom_call.1} parent=11 // pred_fallthru
          _
      $region12: #{tpu_custom_call.1} parent=5 // pred_fallthru
        _
      %p159 = scmp.lt.s32.totalorder %s16, 2
      // Predicated region
      $region17: #{tpu_custom_call.1} parent=5 // pred_check
        %p160 = pneg %p159
      $region18: #{tpu_custom_call.1} parent=5 // pred_check_branch
        %162 = sbr.rel (%p160) target = $region20
      $region19: #{tpu_custom_call.1} parent=5 // pred_region
        // Predicated region
        $region21: #{tpu_custom_call.1} parent=19 // pred_check
          %p163 = pneg %p57
        $region22: #{tpu_custom_call.1} parent=19 // pred_check_branch
          %165 = sbr.rel (%p163) target = $region24
        $region23: #{tpu_custom_call.1} parent=19 // pred_region
          %s166 = sand.u32 %s47, 1
          %s167 = scalar_lea.sflag [#allocation3], %s166
          %s168 = sand.u32 %s47, 1
          %s169 = smul.addr %s168, 8
          %s170 = scalar_lea.vmem [#allocation2], %s169
          %s172 = ssub.s32 128, 128
          %173 = vsyncadd %s167, %s172
          %s174 = smul.addr %s16, 128
          %s175 = scalar_lea.hbm %s1, %s174
          %s177 = sshll.u32 %s170, 4
          %s178 = int_to_ptr.vmem [resolvable:$true] %s177
          %180 = dma.hbm_to_vmem [thread:$0]  %s175, 128, %s178, %s167
        $region24: #{tpu_custom_call.1} parent=19 // pred_fallthru
          _
        // Predicated region
        $region25: #{tpu_custom_call.1} parent=19 // pred_check
          %p181 = pneg %p83
        $region26: #{tpu_custom_call.1} parent=19 // pred_check_branch
          %183 = sbr.rel (%p181) target = $region28
        $region27: #{tpu_custom_call.1} parent=19 // pred_region
          %p184 = scmp.lt.s32.totalorder %s16, 1
          %s185 = scalar_select %p184, %s16, 1
          %s186 = smul.addr %s185, 4
          %s187 = scalar_lea.vmem %s2, %s186
        $region28: #{tpu_custom_call.1} parent=19 // pred_fallthru
          _
        // Predicated region
        $region29: #{tpu_custom_call.1} parent=19 // pred_check
          %p188 = pneg %p109
        $region30: #{tpu_custom_call.1} parent=19 // pred_check_branch
          %190 = sbr.rel (%p188) target = $region32
        $region31: #{tpu_custom_call.1} parent=19 // pred_region
          %p191 = scmp.lt.s32.totalorder %s16, 1
          %s192 = scalar_select %p191, %s16, 1
          %s193 = smul.addr %s192, 4
          %s194 = scalar_lea.vmem %s3, %s193
        $region32: #{tpu_custom_call.1} parent=19 // pred_fallthru
          _
      $region20: #{tpu_custom_call.1} parent=5 // pred_fallthru
        _
      %p195 = scmp.le.s32.totalorder 1, %s16
      %p196 = scmp.lt.s32.totalorder %s16, 3
      %p197 = pnand %p195, %p196
      %p198 = pneg %p197
      // Predicated region
      $region33: #{tpu_custom_call.1} parent=5 // pred_check
        _
      $region34: #{tpu_custom_call.1} parent=5 // pred_check_branch
        %200 = sbr.rel (%p197) target = $region36
      $region35: #{tpu_custom_call.1} parent=5 // pred_region
        %s201 = ssub.s32 %s16, 1
        %s202 = sand.u32 %s50, 1
        %s203 = scalar_lea.sflag [#allocation3], %s202
        %s204 = sand.u32 %s50, 1
        %s205 = smul.addr %s204, 8
        %s206 = scalar_lea.vmem [#allocation2], %s205
        // Predicated region
        $region37: #{tpu_custom_call.1} parent=35 // pred_check
          %p207 = pneg %p63
        $region38: #{tpu_custom_call.1} parent=35 // pred_check_branch
          %209 = sbr.rel (%p207) target = $region40
        $region39: #{tpu_custom_call.1} parent=35 // pred_region
          %210 = dma.done %s203, 128
        $region40: #{tpu_custom_call.1} parent=35 // pred_fallthru
          _
        %p211 = pneg %p37
        %p212 = pneg %p34
        %s213 = sand.u32 %s50, 1
        %s214 = scalar_lea.sflag [#allocation3], %s213
        %s215 = sand.u32 %s50, 1
        %s216 = smul.addr %s215, 8
        %s217 = scalar_lea.vmem [#allocation2], %s216
        %p218 = pneg %p63
        %p219 = pneg %p60
        %p220 = scmp.lt.s32.totalorder %s21, 1
        %s221 = scalar_select %p220, %s21, 1
        %s222 = smul.addr %s221, 4
        %s223 = scalar_lea.vmem %s2, %s222
        %p224 = pneg %p89
        %p225 = pneg %p86
        %p226 = scmp.lt.s32.totalorder %s21, 1
        %s227 = scalar_select %p226, %s21, 1
        %s228 = smul.addr %s227, 4
        %s229 = scalar_lea.vmem %s3, %s228
        %p230 = pneg %p115
        %p231 = pneg %p112
        %p232 = pneg %p141
        %p233 = pneg %p138
        %s234 = sand.u32 %s128, 1
        %s235 = scalar_lea.sflag [#allocation4], %s234
        %s236 = sand.u32 %s128, 1
        %s237 = smul.addr %s236, 8
        %s238 = scalar_lea.vmem [#allocation5], %s237
        %p239 = scmp.lt.s32.totalorder %s21, 1
        %s240 = scalar_select %p239, %s21, 1
        %s241 = smul.addr %s240, 4
        %s242 = scalar_lea.vmem %s2, %s241
        %p243 = scmp.lt.s32.totalorder %s21, 1
        %s244 = scalar_select %p243, %s21, 1
        %s245 = smul.addr %s244, 4
        %s246 = scalar_lea.vmem %s3, %s245
        %v247 = vld [vmem:[%s206] sm:$0xff]
        %v248 = vrot.slane %v247, 4
        %v249 = vadd.f32 %v247, %v248
        %v250 = vrot.slane %v249, 2
        %v251 = vadd.f32 %v249, %v250
        %v252 = vrot.slane %v251, 1
        %v253 = vadd.f32 %v251, %v252
        %v254 = vmul.f32 %v247, %v247
        %v255 = vrot.slane %v254, 4
        %v256 = vadd.f32 %v254, %v255
        %v257 = vrot.slane %v256, 2
        %v258 = vadd.f32 %v256, %v257
        %v259 = vrot.slane %v258, 1
        %v260 = vadd.f32 %v258, %v259
        %v261 = vmul.f32 %v253, 0.125
        %v262 = vmul.f32 %v260, 0.125
        %v263 = vmul.f32 %v261, %v261
        %v264 = vsub.f32 %v262, %v263
        %v265 = vmax.f32 %v264, 0.0
        %v266 = vadd.f32 %v265, 1e-05
        %v267 = vrsqrt.pop %v266
        %v268 = vld [vmem:[%s0] sm:$0xff]
        %v269 = vld [vmem:[%s242] sm:$0xf]
        %v270 = vld [vmem:[%s246] sm:$0xf]
        %vm271 = vcmask 31744
        %v273 = vsel %vm271, %v268, 0
        %vm275 = vcmask 1043456
        %v277 = vsel %vm275, %v269, 0
        %279 = vmatprep.subr.mxu0 0.0
        %280 = vmatpush1.msra.mxu0 %v277
        %281 = vmatprep.subr.mxu0 0.0
        %282 = vmatpush1.msra.mxu0 0.0
        %283 = vmatprep.subr.mxu0 0.0
        %284 = vmatpush1.msra.mxu0 0.0
        %285 = vmatprep.subr.mxu0 0.0
        %286 = vmatpush1.msra.mxu0 0.0
        %287 = vmatprep.subr.mxu0 0.0
        %288 = vmatpush1.msra.mxu0 0.0
        %289 = vmatprep.subr.mxu0 0.0
        %290 = vmatpush1.msra.mxu0 0.0
        %291 = vmatprep.subr.mxu0 0.0
        %292 = vmatpush1.msra.mxu0 0.0
        %293 = vmatprep.subr.mxu0 0.0
        %294 = vmatpush1.msra.mxu0 0.0
        %295 = vmatprep.subr.mxu0 0.0
        %296 = vmatpush1.msra.mxu0 0.0
        %297 = vmatprep.subr.mxu0 0.0
        %298 = vmatpush1.msra.mxu0 0.0
        %299 = vmatprep.subr.mxu0 0.0
        %300 = vmatpush1.msra.mxu0 0.0
        %301 = vmatprep.subr.mxu0 0.0
        %302 = vmatpush1.msra.mxu0 0.0
        %303 = vmatprep.subr.mxu0 0.0
        %304 = vmatpush1.msra.mxu0 0.0
        %305 = vmatprep.subr.mxu0 0.0
        %306 = vmatpush1.msra.mxu0 0.0
        %307 = vmatprep.subr.mxu0 0.0
        %308 = vmatpush1.msra.mxu0 0.0
        %309 = vmatprep.subr.mxu0 0.0
        %310 = vmatpush1.msra.mxu0 0.0
        %311 = vmatprep.subr.mxu0 0.0
        %312 = vmatpush1.msra.mxu0 0.0
        %313 = vmatprep.subr.mxu0 0.0
        %314 = vmatpush1.msra.mxu0 0.0
        %315 = vmatprep.subr.mxu0 0.0
        %316 = vmatpush1.msra.mxu0 0.0
        %317 = vmatprep.subr.mxu0 0.0
        %318 = vmatpush1.msra.mxu0 0.0
        %319 = vmatprep.subr.mxu0 0.0
        %320 = vmatpush1.msra.mxu0 0.0
        %321 = vmatprep.subr.mxu0 0.0
        %322 = vmatpush1.msra.mxu0 0.0
        %323 = vmatprep.subr.mxu0 0.0
        %324 = vmatpush1.msra.mxu0 0.0
        %325 = vmatprep.subr.mxu0 0.0
        %326 = vmatpush1.msra.mxu0 0.0
        %327 = vmatprep.subr.mxu0 0.0
        %328 = vmatpush1.msra.mxu0 0.0
        %329 = vmatprep.subr.mxu0 0.0
        %330 = vmatpush1.msra.mxu0 0.0
        %331 = vmatprep.subr.mxu0 0.0
        %332 = vmatpush1.msra.mxu0 0.0
        %333 = vmatprep.subr.mxu0 0.0
        %334 = vmatpush1.msra.mxu0 0.0
        %335 = vmatprep.subr.mxu0 0.0
        %336 = vmatpush1.msra.mxu0 0.0
        %337 = vmatprep.subr.mxu0 0.0
        %338 = vmatpush1.msra.mxu0 0.0
        %339 = vmatprep.subr.mxu0 0.0
        %340 = vmatpush1.msra.mxu0 0.0
        %341 = vmatprep.subr.mxu0 0.0
        %342 = vmatpush1.msra.mxu0 0.0
        %343 = vmatprep.mubr.f32.mxu0 0.0
        %344 = vmatmul.mubr.f32.gmra.mrb[0].mxu0 %v273
        %v345 = vpop.f32.mrb[0].mxu0
        %v346 = vadd.f32 0.0, %v345
        %v347 = vpop.f32.mrb[0].mxu0
        %348 = vdwg.mxu0
        %v350 = vsel %vm275, %v270, 0
        %352 = vmatprep.subr.mxu0 0.0
        %353 = vmatpush1.msra.mxu0 %v350
        %354 = vmatprep.subr.mxu0 0.0
        %355 = vmatpush1.msra.mxu0 0.0
        %356 = vmatprep.subr.mxu0 0.0
        %357 = vmatpush1.msra.mxu0 0.0
        %358 = vmatprep.subr.mxu0 0.0
        %359 = vmatpush1.msra.mxu0 0.0
        %360 = vmatprep.subr.mxu0 0.0
        %361 = vmatpush1.msra.mxu0 0.0
        %362 = vmatprep.subr.mxu0 0.0
        %363 = vmatpush1.msra.mxu0 0.0
        %364 = vmatprep.subr.mxu0 0.0
        %365 = vmatpush1.msra.mxu0 0.0
        %366 = vmatprep.subr.mxu0 0.0
        %367 = vmatpush1.msra.mxu0 0.0
        %368 = vmatprep.subr.mxu0 0.0
        %369 = vmatpush1.msra.mxu0 0.0
        %370 = vmatprep.subr.mxu0 0.0
        %371 = vmatpush1.msra.mxu0 0.0
        %372 = vmatprep.subr.mxu0 0.0
        %373 = vmatpush1.msra.mxu0 0.0
        %374 = vmatprep.subr.mxu0 0.0
        %375 = vmatpush1.msra.mxu0 0.0
        %376 = vmatprep.subr.mxu0 0.0
        %377 = vmatpush1.msra.mxu0 0.0
        %378 = vmatprep.subr.mxu0 0.0
        %379 = vmatpush1.msra.mxu0 0.0
        %380 = vmatprep.subr.mxu0 0.0
        %381 = vmatpush1.msra.mxu0 0.0
        %382 = vmatprep.subr.mxu0 0.0
        %383 = vmatpush1.msra.mxu0 0.0
        %384 = vmatprep.subr.mxu0 0.0
        %385 = vmatpush1.msra.mxu0 0.0
        %386 = vmatprep.subr.mxu0 0.0
        %387 = vmatpush1.msra.mxu0 0.0
        %388 = vmatprep.subr.mxu0 0.0
        %389 = vmatpush1.msra.mxu0 0.0
        %390 = vmatprep.subr.mxu0 0.0
        %391 = vmatpush1.msra.mxu0 0.0
        %392 = vmatprep.subr.mxu0 0.0
        %393 = vmatpush1.msra.mxu0 0.0
        %394 = vmatprep.subr.mxu0 0.0
        %395 = vmatpush1.msra.mxu0 0.0
        %396 = vmatprep.subr.mxu0 0.0
        %397 = vmatpush1.msra.mxu0 0.0
        %398 = vmatprep.subr.mxu0 0.0
        %399 = vmatpush1.msra.mxu0 0.0
        %400 = vmatprep.subr.mxu0 0.0
        %401 = vmatpush1.msra.mxu0 0.0
        %402 = vmatprep.subr.mxu0 0.0
        %403 = vmatpush1.msra.mxu0 0.0
        %404 = vmatprep.subr.mxu0 0.0
        %405 = vmatpush1.msra.mxu0 0.0
        %406 = vmatprep.subr.mxu0 0.0
        %407 = vmatpush1.msra.mxu0 0.0
        %408 = vmatprep.subr.mxu0 0.0
        %409 = vmatpush1.msra.mxu0 0.0
        %410 = vmatprep.subr.mxu0 0.0
        %411 = vmatpush1.msra.mxu0 0.0
        %412 = vmatprep.subr.mxu0 0.0
        %413 = vmatpush1.msra.mxu0 0.0
        %414 = vmatprep.subr.mxu0 0.0
        %415 = vmatpush1.msra.mxu0 0.0
        %416 = vmatprep.mubr.f32.mxu0 0.0
        %417 = vmatmul.mubr.f32.gmra.mrb[0].mxu0 %v273
        %v418 = vpop.f32.mrb[0].mxu0
        %v419 = vadd.f32 0.0, %v418
        %v420 = vpop.f32.mrb[0].mxu0
        %421 = vdwg.mxu0
        %v422 = vsub.f32 %v247, %v261
        %v423 = vmul.f32 %v422, %v267
        %v424 = vmul.f32 %v423, %v346
        %v425 = vadd.f32 %v424, %v419
        %426 = vst [vmem:[%s238] sm:$0xff] %v425
        %s427 = sand.u32 %s128, 1
        %s428 = scalar_lea.sflag [#allocation4], %s427
        %s429 = sand.u32 %s128, 1
        %s430 = smul.addr %s429, 8
        %s431 = scalar_lea.vmem [#allocation5], %s430
        // Predicated region
        $region41: #{tpu_custom_call.1} parent=35 // pred_check
          %p432 = pneg %p138
        $region42: #{tpu_custom_call.1} parent=35 // pred_check_branch
          %434 = sbr.rel (%p432) target = $region44
        $region43: #{tpu_custom_call.1} parent=35 // pred_region
          %s436 = ssub.s32 128, 128
          %437 = vsyncadd %s428, %s436
          %s438 = smul.addr %s21, 128
          %s439 = scalar_lea.hbm %s4, %s438
          %s441 = sshll.u32 %s431, 4
          %s442 = int_to_ptr.vmem [resolvable:$true] %s441
          %444 = dma.vmem_to_hbm [thread:$0]  %s442, 128, %s439, %s428
        $region44: #{tpu_custom_call.1} parent=35 // pred_fallthru
          _
      $region36: #{tpu_custom_call.1} parent=5 // pred_fallthru
        _
      %p445 = scmp.le.s32.totalorder 2, %s16
      // Predicated region
      $region45: #{tpu_custom_call.1} parent=5 // pred_check
        %p446 = pneg %p445
      $region46: #{tpu_custom_call.1} parent=5 // pred_check_branch
        %448 = sbr.rel (%p446) target = $region48
      $region47: #{tpu_custom_call.1} parent=5 // pred_region
        %s449 = ssub.s32 %s16, 2
        // Predicated region
        $region49: #{tpu_custom_call.1} parent=47 // pred_check
          %p450 = pneg %p144
        $region50: #{tpu_custom_call.1} parent=47 // pred_check_branch
          %452 = sbr.rel (%p450) target = $region52
        $region51: #{tpu_custom_call.1} parent=47 // pred_region
          %s453 = sand.u32 %s129, 1
          %s454 = scalar_lea.sflag [#allocation4], %s453
          %s455 = sand.u32 %s129, 1
          %s456 = smul.addr %s455, 8
          %s457 = scalar_lea.vmem [#allocation5], %s456
          %458 = dma.done %s454, 128
        $region52: #{tpu_custom_call.1} parent=47 // pred_fallthru
          _
      $region48: #{tpu_custom_call.1} parent=5 // pred_fallthru
        _
    $region6: #{tpu_custom_call.1} parent=1 // loop_footer
      %s20 = sadd.s32 1, %s16
    $region7: #{tpu_custom_call.1} parent=1 // loop_footer_branch
      %15 = sbr.rel target = $region3
    $region8: #{tpu_custom_call.1} parent=1 // loop_exit
      _
    %459 = vsyncpa [#allocation3], 1
    %s460 = scalar_lea.sflag [#allocation3], 1
    %461 = vsyncpa %s460, 1
    %462 = vsyncpa [#allocation4], 1
    %s463 = scalar_lea.sflag [#allocation4], 1
    %464 = vsyncpa %s463, 1

</llo_original>
